<compile_context>
chip_gen: v5e
topology: v5e:2x2
jax: 0.10.0
libtpu: 0.0.40
codegen_flags: <defaults>
</compile_context>

<pallas_src>
import functools

import jax
import jax.numpy as jnp
from jax.experimental import pallas as pl
from jax.experimental.pallas import tpu as pltpu


def _dropout_mul_kernel(x_ref, mask_ref, o_ref, *, L, C):
    """One grid step (drop_graph=False).

    x_ref, o_ref: (TN, L*C) lane-dense view of a block of nodes.
    mask_ref:     (TN, C)   per-node dropout mask in x.dtype ({0, 1/(1-p)}).

    The mask is shared across the L axis, so multiply lane-slab by lane-slab;
    when C % 128 == 0 every load/store is a full, unmasked vector op and no
    large temporaries are materialized.
    """
    m = mask_ref[...]
    for l in range(L):                       # L is small and static -> unrolled
        sl = slice(l * C, (l + 1) * C)
        o_ref[:, sl] = x_ref[:, sl] * m


def _dropout_gather_mul_kernel(x_ref, ids_ref, gmask_ref, o_ref, *, L, C, G):
    """One grid step (drop_graph=True): gather the per-graph mask in-kernel.

    x_ref, o_ref: (TN, L*C)
    ids_ref:      (TN, 1) int32 graph id per node
    gmask_ref:    (G, C)  per-graph mask in x.dtype (resident in VMEM)

    The gather is a one-hot (TN, G) @ (G, C) matmul on the otherwise idle MXU,
    avoiding an HBM-materialized (N, C) gathered mask.
    """
    ids = ids_ref[...]                                            # (TN, 1) int32
    tn = ids.shape[0]
    g_iota = jax.lax.broadcasted_iota(jnp.int32, (tn, G), 1)      # (TN, G)
    one_hot = (ids == g_iota).astype(gmask_ref.dtype)             # (TN, G)
    m = jnp.dot(one_hot, gmask_ref[...],
                preferred_element_type=jnp.float32).astype(x_ref.dtype)  # (TN, C)
    for l in range(L):
        sl = slice(l * C, (l + 1) * C)
        o_ref[:, sl] = x_ref[:, sl] * m


def _pick_tn(n, node_bytes, pack, target_bytes=4 * 1024 * 1024):
    """Nodes per block: ~target_bytes per x tile, rounded to the sublane pack,
    capped so the grid has >= 4 steps (v7x megacore + pipeline overlap)."""
    cdiv = lambda a, b: -(-a // b)
    tn = max(1, target_bytes // max(1, node_bytes))
    tn = min(tn, cdiv(n, 4))          # aim for >= 4 grid steps when possible
    if tn >= n:
        return int(n)
    tn = max(pack, (tn // pack) * pack)
    return int(min(tn, n))


def equivariant_dropout_sh(x, seed, *, drop_prob, drop_graph=False, batch=None,
                           num_graphs=None, training=True):
    """JAX/Pallas equivalent of EquivariantDropoutArraySphericalHarmonics.forward.

    Note: callers must thread a fresh `seed` per call; reusing a seed
    reproduces the identical dropout mask.
    """
    if (not training) or drop_prob == 0.0:
        return x
    assert x.ndim == 3
    N, L, C = x.shape
    keep_prob = 1.0 - float(drop_prob)
    scale = 1.0 / keep_prob
    key = jax.random.PRNGKey(seed)

    itemsize = jnp.dtype(x.dtype).itemsize
    pack = max(8, 32 // itemsize)                 # 8 f32, 16 bf16, 32 int8
    tn = _pick_tn(N, L * C * itemsize, pack)
    grid = (pl.cdiv(N, tn),)

    x2 = x.reshape(N, L * C)                      # lane-dense 2D view (free)

    cparams = pltpu.CompilerParams(
        dimension_semantics=("parallel",),
        vmem_limit_bytes=32 * 1024 * 1024,
    )
    x_spec = pl.BlockSpec((tn, L * C), lambda i: (i, 0))
    out_spec = pl.BlockSpec((tn, L * C), lambda i: (i, 0))

    if drop_graph:
        assert batch is not None
        assert num_graphs is not None, (
            "num_graphs must be provided statically when drop_graph=True")
        G = int(num_graphs)
        keep = jax.random.bernoulli(key, p=keep_prob, shape=(G, C))
        graph_mask = keep.astype(x.dtype) * jnp.asarray(scale, dtype=x.dtype)  # (G, C)
        ids = batch.astype(jnp.int32).reshape(N, 1)

        out2 = pl.pallas_call(
            functools.partial(_dropout_gather_mul_kernel, L=L, C=C, G=G),
            out_shape=jax.ShapeDtypeStruct((N, L * C), x.dtype),
            grid=grid,
            in_specs=[
                x_spec,
                pl.BlockSpec((tn, 1), lambda i: (i, 0)),
                pl.BlockSpec((G, C), lambda i: (0, 0)),   # whole, stays resident
            ],
            out_specs=out_spec,
            compiler_params=cparams,
        )(x2, ids, graph_mask)
    else:
        # One mask draw total, in x.dtype (halves mask HBM traffic for bf16).
        # TODO(synk): optionally generate the mask in-kernel with the HW PRNG
        # (pltpu.prng_seed / prng_random_bits) to remove the mask round-trip.
        keep = jax.random.bernoulli(key, p=keep_prob, shape=(N, C))
        mask = keep.astype(x.dtype) * jnp.asarray(scale, dtype=x.dtype)        # (N, C)

        out2 = pl.pallas_call(
            functools.partial(_dropout_mul_kernel, L=L, C=C),
            out_shape=jax.ShapeDtypeStruct((N, L * C), x.dtype),
            grid=grid,
            in_specs=[
                x_spec,
                pl.BlockSpec((tn, C), lambda i: (i, 0)),
            ],
            out_specs=out_spec,
            compiler_params=cparams,
        )(x2, mask)

    return out2.reshape(N, L, C)


if __name__ == "__main__":
    key = jax.random.PRNGKey(0)

    # --- Case 1: f32, drop_graph=False -----------------------------------
    N, L, C = 8, 16, 128
    drop_prob = 0.5
    scale = 1.0 / (1.0 - drop_prob)
    x = jax.random.normal(key, (N, L, C), dtype=jnp.float32)

    out = equivariant_dropout_sh(x, seed=1234, drop_prob=drop_prob, training=True)
    out = jax.block_until_ready(out)
    assert out.shape == x.shape and out.dtype == x.dtype
    ratio = out / x
    assert bool(jnp.all(jnp.isclose(ratio, ratio[:, :1, :], atol=1e-5))), \
        "mask not shared across L"
    assert bool(jnp.all(jnp.isclose(ratio, 0.0, atol=1e-5)
                        | jnp.isclose(ratio, scale, atol=1e-4))), \
        "mask values not in {0, 1/(1-p)}"

    # --- Case 2: f32, drop_graph=True (in-kernel per-graph gather) --------
    batch = jnp.array([0, 0, 0, 1, 1, 1, 2, 2], dtype=jnp.int32)
    out_g = equivariant_dropout_sh(x, seed=4321, drop_prob=drop_prob,
                                   drop_graph=True, batch=batch, num_graphs=3,
                                   training=True)
    out_g = jax.block_until_ready(out_g)
    ratio_g = out_g / x
    # Nodes in the same graph must share the same (1, C) mask.
    assert bool(jnp.all(jnp.isclose(ratio_g[0], ratio_g[1], atol=1e-5)))
    assert bool(jnp.all(jnp.isclose(ratio_g[3], ratio_g[5], atol=1e-5)))
    assert bool(jnp.all(jnp.isclose(ratio_g[6], ratio_g[7], atol=1e-5)))
    assert bool(jnp.all(jnp.isclose(ratio_g, 0.0, atol=1e-5)
                        | jnp.isclose(ratio_g, scale, atol=1e-4)))

    # --- Case 3: bf16, L=9 (not a sublane multiple), multi-step grid ------
    N2, L2, C2 = 72, 9, 128
    x2 = jax.random.normal(jax.random.PRNGKey(1), (N2, L2, C2), dtype=jnp.bfloat16)
    out2 = equivariant_dropout_sh(x2, seed=7, drop_prob=drop_prob, training=True)
    out2 = jax.block_until_ready(out2)
    r2 = out2.astype(jnp.float32) / x2.astype(jnp.float32)
    assert bool(jnp.all(jnp.isclose(r2, r2[:, :1, :], atol=1e-3)))
    assert bool(jnp.all(jnp.isclose(r2, 0.0, atol=1e-3)
                        | jnp.isclose(r2, scale, atol=1e-2)))

    # Eval / p==0 path returns x unchanged (glue, no kernel launch).
    out_eval = equivariant_dropout_sh(x, seed=0, drop_prob=drop_prob, training=False)
    assert out_eval is x

    print("KERNEL_OK")
</pallas_src>

<mosaic_0001>
module attributes {stable_mosaic.version = 11 : i64} {
  func.func @_dropout_mul_kernel(%arg0: i32, %arg1: memref<8x2048xf32, #tpu.memory_space<vmem>>, %arg2: memref<8x128xf32, #tpu.memory_space<vmem>>, %arg3: memref<8x2048xf32, #tpu.memory_space<vmem>>) attributes {dimension_semantics = [#tpu.dimension_semantics<parallel>], iteration_bounds = array<i64: 1>, scalar_prefetch = 0 : i64, scratch_operands = 0 : i64, tpu.core_type = #tpu.core_type<tc>, window_params = [{transform_indices = @transform_0, window_bounds = array<i64: 8, 2048>}, {transform_indices = @transform_1, window_bounds = array<i64: 8, 128>}, {transform_indices = @transform_2, window_bounds = array<i64: 8, 2048>}]} {
    %c0 = arith.constant 0 : index
    %c0_0 = arith.constant 0 : index
    %0 = vector.load %arg2[%c0, %c0_0] : memref<8x128xf32, #tpu.memory_space<vmem>>, vector<8x128xf32>
    %c0_1 = arith.constant 0 : index
    %c0_2 = arith.constant 0 : index
    %1 = vector.load %arg1[%c0_1, %c0_2] : memref<8x2048xf32, #tpu.memory_space<vmem>>, vector<8x128xf32>
    %2 = arith.mulf %1, %0 : vector<8x128xf32>
    %c0_3 = arith.constant 0 : index
    %c0_4 = arith.constant 0 : index
    %3 = vector.load %arg3[%c0_3, %c0_4] : memref<8x2048xf32, #tpu.memory_space<vmem>>, vector<8x128xf32>
    tpu.vector_store %arg3[%c0_3, %c0_4], %2 {strides = array<i32>} : memref<8x2048xf32, #tpu.memory_space<vmem>>, vector<8x128xf32>,
    %c0_5 = arith.constant 0 : index
    %c128 = arith.constant 128 : index
    %4 = vector.load %arg1[%c0_5, %c128] : memref<8x2048xf32, #tpu.memory_space<vmem>>, vector<8x128xf32>
    %5 = arith.mulf %4, %0 : vector<8x128xf32>
    %c0_6 = arith.constant 0 : index
    %c128_7 = arith.constant 128 : index
    %6 = vector.load %arg3[%c0_6, %c128_7] : memref<8x2048xf32, #tpu.memory_space<vmem>>, vector<8x128xf32>
    tpu.vector_store %arg3[%c0_6, %c128_7], %5 {strides = array<i32>} : memref<8x2048xf32, #tpu.memory_space<vmem>>, vector<8x128xf32>,
    %c0_8 = arith.constant 0 : index
    %c256 = arith.constant 256 : index
    %7 = vector.load %arg1[%c0_8, %c256] : memref<8x2048xf32, #tpu.memory_space<vmem>>, vector<8x128xf32>
    %8 = arith.mulf %7, %0 : vector<8x128xf32>
    %c0_9 = arith.constant 0 : index
    %c256_10 = arith.constant 256 : index
    %9 = vector.load %arg3[%c0_9, %c256_10] : memref<8x2048xf32, #tpu.memory_space<vmem>>, vector<8x128xf32>
    tpu.vector_store %arg3[%c0_9, %c256_10], %8 {strides = array<i32>} : memref<8x2048xf32, #tpu.memory_space<vmem>>, vector<8x128xf32>,
    %c0_11 = arith.constant 0 : index
    %c384 = arith.constant 384 : index
    %10 = vector.load %arg1[%c0_11, %c384] : memref<8x2048xf32, #tpu.memory_space<vmem>>, vector<8x128xf32>
    %11 = arith.mulf %10, %0 : vector<8x128xf32>
    %c0_12 = arith.constant 0 : index
    %c384_13 = arith.constant 384 : index
    %12 = vector.load %arg3[%c0_12, %c384_13] : memref<8x2048xf32, #tpu.memory_space<vmem>>, vector<8x128xf32>
    tpu.vector_store %arg3[%c0_12, %c384_13], %11 {strides = array<i32>} : memref<8x2048xf32, #tpu.memory_space<vmem>>, vector<8x128xf32>,
    %c0_14 = arith.constant 0 : index
    %c512 = arith.constant 512 : index
    %13 = vector.load %arg1[%c0_14, %c512] : memref<8x2048xf32, #tpu.memory_space<vmem>>, vector<8x128xf32>
    %14 = arith.mulf %13, %0 : vector<8x128xf32>
    %c0_15 = arith.constant 0 : index
    %c512_16 = arith.constant 512 : index
    %15 = vector.load %arg3[%c0_15, %c512_16] : memref<8x2048xf32, #tpu.memory_space<vmem>>, vector<8x128xf32>
    tpu.vector_store %arg3[%c0_15, %c512_16], %14 {strides = array<i32>} : memref<8x2048xf32, #tpu.memory_space<vmem>>, vector<8x128xf32>,
    %c0_17 = arith.constant 0 : index
    %c640 = arith.constant 640 : index
    %16 = vector.load %arg1[%c0_17, %c640] : memref<8x2048xf32, #tpu.memory_space<vmem>>, vector<8x128xf32>
    %17 = arith.mulf %16, %0 : vector<8x128xf32>
    %c0_18 = arith.constant 0 : index
    %c640_19 = arith.constant 640 : index
    %18 = vector.load %arg3[%c0_18, %c640_19] : memref<8x2048xf32, #tpu.memory_space<vmem>>, vector<8x128xf32>
    tpu.vector_store %arg3[%c0_18, %c640_19], %17 {strides = array<i32>} : memref<8x2048xf32, #tpu.memory_space<vmem>>, vector<8x128xf32>,
    %c0_20 = arith.constant 0 : index
    %c768 = arith.constant 768 : index
    %19 = vector.load %arg1[%c0_20, %c768] : memref<8x2048xf32, #tpu.memory_space<vmem>>, vector<8x128xf32>
    %20 = arith.mulf %19, %0 : vector<8x128xf32>
    %c0_21 = arith.constant 0 : index
    %c768_22 = arith.constant 768 : index
    %21 = vector.load %arg3[%c0_21, %c768_22] : memref<8x2048xf32, #tpu.memory_space<vmem>>, vector<8x128xf32>
    tpu.vector_store %arg3[%c0_21, %c768_22], %20 {strides = array<i32>} : memref<8x2048xf32, #tpu.memory_space<vmem>>, vector<8x128xf32>,
    %c0_23 = arith.constant 0 : index
    %c896 = arith.constant 896 : index
    %22 = vector.load %arg1[%c0_23, %c896] : memref<8x2048xf32, #tpu.memory_space<vmem>>, vector<8x128xf32>
    %23 = arith.mulf %22, %0 : vector<8x128xf32>
    %c0_24 = arith.constant 0 : index
    %c896_25 = arith.constant 896 : index
    %24 = vector.load %arg3[%c0_24, %c896_25] : memref<8x2048xf32, #tpu.memory_space<vmem>>, vector<8x128xf32>
    tpu.vector_store %arg3[%c0_24, %c896_25], %23 {strides = array<i32>} : memref<8x2048xf32, #tpu.memory_space<vmem>>, vector<8x128xf32>,
    %c0_26 = arith.constant 0 : index
    %c1024 = arith.constant 1024 : index
    %25 = vector.load %arg1[%c0_26, %c1024] : memref<8x2048xf32, #tpu.memory_space<vmem>>, vector<8x128xf32>
    %26 = arith.mulf %25, %0 : vector<8x128xf32>
    %c0_27 = arith.constant 0 : index
    %c1024_28 = arith.constant 1024 : index
    %27 = vector.load %arg3[%c0_27, %c1024_28] : memref<8x2048xf32, #tpu.memory_space<vmem>>, vector<8x128xf32>
    tpu.vector_store %arg3[%c0_27, %c1024_28], %26 {strides = array<i32>} : memref<8x2048xf32, #tpu.memory_space<vmem>>, vector<8x128xf32>,
    %c0_29 = arith.constant 0 : index
    %c1152 = arith.constant 1152 : index
    %28 = vector.load %arg1[%c0_29, %c1152] : memref<8x2048xf32, #tpu.memory_space<vmem>>, vector<8x128xf32>
    %29 = arith.mulf %28, %0 : vector<8x128xf32>
    %c0_30 = arith.constant 0 : index
    %c1152_31 = arith.constant 1152 : index
    %30 = vector.load %arg3[%c0_30, %c1152_31] : memref<8x2048xf32, #tpu.memory_space<vmem>>, vector<8x128xf32>
    tpu.vector_store %arg3[%c0_30, %c1152_31], %29 {strides = array<i32>} : memref<8x2048xf32, #tpu.memory_space<vmem>>, vector<8x128xf32>,
    %c0_32 = arith.constant 0 : index
    %c1280 = arith.constant 1280 : index
    %31 = vector.load %arg1[%c0_32, %c1280] : memref<8x2048xf32, #tpu.memory_space<vmem>>, vector<8x128xf32>
    %32 = arith.mulf %31, %0 : vector<8x128xf32>
    %c0_33 = arith.constant 0 : index
    %c1280_34 = arith.constant 1280 : index
    %33 = vector.load %arg3[%c0_33, %c1280_34] : memref<8x2048xf32, #tpu.memory_space<vmem>>, vector<8x128xf32>
    tpu.vector_store %arg3[%c0_33, %c1280_34], %32 {strides = array<i32>} : memref<8x2048xf32, #tpu.memory_space<vmem>>, vector<8x128xf32>,
    %c0_35 = arith.constant 0 : index
    %c1408 = arith.constant 1408 : index
    %34 = vector.load %arg1[%c0_35, %c1408] : memref<8x2048xf32, #tpu.memory_space<vmem>>, vector<8x128xf32>
    %35 = arith.mulf %34, %0 : vector<8x128xf32>
    %c0_36 = arith.constant 0 : index
    %c1408_37 = arith.constant 1408 : index
    %36 = vector.load %arg3[%c0_36, %c1408_37] : memref<8x2048xf32, #tpu.memory_space<vmem>>, vector<8x128xf32>
    tpu.vector_store %arg3[%c0_36, %c1408_37], %35 {strides = array<i32>} : memref<8x2048xf32, #tpu.memory_space<vmem>>, vector<8x128xf32>,
    %c0_38 = arith.constant 0 : index
    %c1536 = arith.constant 1536 : index
    %37 = vector.load %arg1[%c0_38, %c1536] : memref<8x2048xf32, #tpu.memory_space<vmem>>, vector<8x128xf32>
    %38 = arith.mulf %37, %0 : vector<8x128xf32>
    %c0_39 = arith.constant 0 : index
    %c1536_40 = arith.constant 1536 : index
    %39 = vector.load %arg3[%c0_39, %c1536_40] : memref<8x2048xf32, #tpu.memory_space<vmem>>, vector<8x128xf32>
    tpu.vector_store %arg3[%c0_39, %c1536_40], %38 {strides = array<i32>} : memref<8x2048xf32, #tpu.memory_space<vmem>>, vector<8x128xf32>,
    %c0_41 = arith.constant 0 : index
    %c1664 = arith.constant 1664 : index
    %40 = vector.load %arg1[%c0_41, %c1664] : memref<8x2048xf32, #tpu.memory_space<vmem>>, vector<8x128xf32>
    %41 = arith.mulf %40, %0 : vector<8x128xf32>
    %c0_42 = arith.constant 0 : index
    %c1664_43 = arith.constant 1664 : index
    %42 = vector.load %arg3[%c0_42, %c1664_43] : memref<8x2048xf32, #tpu.memory_space<vmem>>, vector<8x128xf32>
    tpu.vector_store %arg3[%c0_42, %c1664_43], %41 {strides = array<i32>} : memref<8x2048xf32, #tpu.memory_space<vmem>>, vector<8x128xf32>,
    %c0_44 = arith.constant 0 : index
    %c1792 = arith.constant 1792 : index
    %43 = vector.load %arg1[%c0_44, %c1792] : memref<8x2048xf32, #tpu.memory_space<vmem>>, vector<8x128xf32>
    %44 = arith.mulf %43, %0 : vector<8x128xf32>
    %c0_45 = arith.constant 0 : index
    %c1792_46 = arith.constant 1792 : index
    %45 = vector.load %arg3[%c0_45, %c1792_46] : memref<8x2048xf32, #tpu.memory_space<vmem>>, vector<8x128xf32>
    tpu.vector_store %arg3[%c0_45, %c1792_46], %44 {strides = array<i32>} : memref<8x2048xf32, #tpu.memory_space<vmem>>, vector<8x128xf32>,
    %c0_47 = arith.constant 0 : index
    %c1920 = arith.constant 1920 : index
    %46 = vector.load %arg1[%c0_47, %c1920] : memref<8x2048xf32, #tpu.memory_space<vmem>>, vector<8x128xf32>
    %47 = arith.mulf %46, %0 : vector<8x128xf32>
    %c0_48 = arith.constant 0 : index
    %c1920_49 = arith.constant 1920 : index
    %48 = vector.load %arg3[%c0_48, %c1920_49] : memref<8x2048xf32, #tpu.memory_space<vmem>>, vector<8x128xf32>
    tpu.vector_store %arg3[%c0_48, %c1920_49], %47 {strides = array<i32>} : memref<8x2048xf32, #tpu.memory_space<vmem>>, vector<8x128xf32>,
    return
  }
  func.func @transform_0(%arg0: i32) -> (i32, i32) {
    %c0_i32 = arith.constant 0 : i32
    %c0_i32_0 = arith.constant 0 : i32
    return %arg0, %c0_i32 : i32, i32
  }
  func.func @transform_1(%arg0: i32) -> (i32, i32) {
    %c0_i32 = arith.constant 0 : i32
    %c0_i32_0 = arith.constant 0 : i32
    return %arg0, %c0_i32 : i32, i32
  }
  func.func @transform_2(%arg0: i32) -> (i32, i32) {
    %c0_i32 = arith.constant 0 : i32
    %c0_i32_0 = arith.constant 0 : i32
    return %arg0, %c0_i32 : i32, i32
  }
}

</mosaic_0001>

<llo_original>
// kernel: tpu_custom_call.1
$region0: #{tpu_custom_call.1}
  #allocation0 [shape = 'u32[]', space=smem, size = 0x4, offset = 0x4, fixed_abs, tag = 'smem constant byte address 0x4 - core index']
  #allocation1 [shape = 'u32[72,128]{1,0:T(1,128)}', space=vmem, size = 0x9000, scoped, tag = 'internal scratch']
  %s0 = inlined_call_operand.hbm [shape: f32[8,2048], index: 0, kind: input, shape index: {}]
  %s1 = inlined_call_operand.hbm [shape: f32[8,128], index: 1, kind: input, shape index: {}]
  %s2 = inlined_call_operand.hbm [shape: f32[8,2048], index: 2, kind: output, shape index: {}]
  %s3 = sld [smem:[#allocation0]]
  $region26: #{tpu_custom_call.1} parent=0
    _
  %s5 = ssub.s32 1, %s3
  %s6 = scalar_select 0, %s5, %s3
  $region1: #{tpu_custom_call.1} parent=0
    #allocation2 [shape = 'u8[65536]{0}', space=vmem, size = 0x10000, scoped, tag = 'input window, operand 0, single buffered']
    #allocation3 [shape = 's32[1]{0}', space=sflag, size = 0x4, scoped, tag = 'scoped memory for tpu_custom_call.1']
    #allocation4 [shape = 's32[1]{0}', space=sflag, size = 0x4, scoped, tag = 'scoped memory for tpu_custom_call.1']
    #allocation5 [shape = 'u8[4096]{0}', space=vmem, size = 0x1000, scoped, tag = 'input window, operand 1, single buffered']
    #allocation6 [shape = 's32[1]{0}', space=sflag, size = 0x4, scoped, tag = 'scoped memory for tpu_custom_call.1']
    #allocation7 [shape = 'u8[65536]{0}', space=vmem, size = 0x10000, scoped, tag = 'output window, operand 0, single buffered']
    %7 = vsyncpa [#allocation3], 0
    %8 = vsyncpa [#allocation6], 0
    %9 = vsyncpa [#allocation4], 0
    // Predicated region
    $region2: #{tpu_custom_call.1} parent=1 // pred_check
      _
    $region3: #{tpu_custom_call.1} parent=1 // pred_check_branch
      %11 = sbr.rel (0) target = $region5
    $region4: #{tpu_custom_call.1} parent=1 // pred_region
      %13 = vsyncadd [#allocation3], 0
      %s15 = sshll.u32 %s0, 4
      %s16 = int_to_ptr.hbm [resolvable:$true] %s15
      %s17 = sshll.u32 [#allocation2], 4
      %s18 = int_to_ptr.vmem [resolvable:$true] %s17
      %20 = dma.hbm_to_vmem [thread:$0]  %s16, 2048, %s18, [#allocation3]
    $region5: #{tpu_custom_call.1} parent=1 // pred_fallthru
      _
    // Predicated region
    $region6: #{tpu_custom_call.1} parent=1 // pred_check
      _
    $region7: #{tpu_custom_call.1} parent=1 // pred_check_branch
      %22 = sbr.rel (0) target = $region9
    $region8: #{tpu_custom_call.1} parent=1 // pred_region
      %24 = vsyncadd [#allocation6], 0
      %s26 = sshll.u32 %s1, 4
      %s27 = int_to_ptr.hbm [resolvable:$true] %s26
      %s28 = sshll.u32 [#allocation5], 4
      %s29 = int_to_ptr.vmem [resolvable:$true] %s28
      %31 = dma.hbm_to_vmem [thread:$0]  %s27, 128, %s29, [#allocation6]
    $region9: #{tpu_custom_call.1} parent=1 // pred_fallthru
      _
    // Predicated region
    $region10: #{tpu_custom_call.1} parent=1 // pred_check
      _
    $region11: #{tpu_custom_call.1} parent=1 // pred_check_branch
      %33 = sbr.rel (0) target = $region13
    $region12: #{tpu_custom_call.1} parent=1 // pred_region
      %35 = dma.done [#allocation3], 2048
    $region13: #{tpu_custom_call.1} parent=1 // pred_fallthru
      _
    // Predicated region
    $region14: #{tpu_custom_call.1} parent=1 // pred_check
      _
    $region15: #{tpu_custom_call.1} parent=1 // pred_check_branch
      %37 = sbr.rel (0) target = $region17
    $region16: #{tpu_custom_call.1} parent=1 // pred_region
      %39 = dma.done [#allocation6], 128
    $region17: #{tpu_custom_call.1} parent=1 // pred_fallthru
      _
    %v40 = vld [vmem:[#allocation5] sm:$0xff]
    %v41 = vld [vmem:[#allocation2] sm:$0xff]
    %v42 = vmul.f32 %v41, %v40
    %43 = vst [vmem:[#allocation7] sm:$0xff] %v42
    %v44 = vld [vmem:[#allocation2 + $0x8] sm:$0xff]
    %v45 = vmul.f32 %v44, %v40
    %46 = vst [vmem:[#allocation7 + $0x8] sm:$0xff] %v45
    %v47 = vld [vmem:[#allocation2 + $0x10] sm:$0xff]
    %v48 = vmul.f32 %v47, %v40
    %49 = vst [vmem:[#allocation7 + $0x10] sm:$0xff] %v48
    %v50 = vld [vmem:[#allocation2 + $0x18] sm:$0xff]
    %v51 = vmul.f32 %v50, %v40
    %52 = vst [vmem:[#allocation7 + $0x18] sm:$0xff] %v51
    %v53 = vld [vmem:[#allocation2 + $0x20] sm:$0xff]
    %v54 = vmul.f32 %v53, %v40
    %55 = vst [vmem:[#allocation7 + $0x20] sm:$0xff] %v54
    %v56 = vld [vmem:[#allocation2 + $0x28] sm:$0xff]
    %v57 = vmul.f32 %v56, %v40
    %58 = vst [vmem:[#allocation7 + $0x28] sm:$0xff] %v57
    %v59 = vld [vmem:[#allocation2 + $0x30] sm:$0xff]
    %v60 = vmul.f32 %v59, %v40
    %61 = vst [vmem:[#allocation7 + $0x30] sm:$0xff] %v60
    %v62 = vld [vmem:[#allocation2 + $0x38] sm:$0xff]
    %v63 = vmul.f32 %v62, %v40
    %64 = vst [vmem:[#allocation7 + $0x38] sm:$0xff] %v63
    %v65 = vld [vmem:[#allocation2 + $0x40] sm:$0xff]
    %v66 = vmul.f32 %v65, %v40
    %67 = vst [vmem:[#allocation7 + $0x40] sm:$0xff] %v66
    %v68 = vld [vmem:[#allocation2 + $0x48] sm:$0xff]
    %v69 = vmul.f32 %v68, %v40
    %70 = vst [vmem:[#allocation7 + $0x48] sm:$0xff] %v69
    %v71 = vld [vmem:[#allocation2 + $0x50] sm:$0xff]
    %v72 = vmul.f32 %v71, %v40
    %73 = vst [vmem:[#allocation7 + $0x50] sm:$0xff] %v72
    %v74 = vld [vmem:[#allocation2 + $0x58] sm:$0xff]
    %v75 = vmul.f32 %v74, %v40
    %76 = vst [vmem:[#allocation7 + $0x58] sm:$0xff] %v75
    %v77 = vld [vmem:[#allocation2 + $0x60] sm:$0xff]
    %v78 = vmul.f32 %v77, %v40
    %79 = vst [vmem:[#allocation7 + $0x60] sm:$0xff] %v78
    %v80 = vld [vmem:[#allocation2 + $0x68] sm:$0xff]
    %v81 = vmul.f32 %v80, %v40
    %82 = vst [vmem:[#allocation7 + $0x68] sm:$0xff] %v81
    %v83 = vld [vmem:[#allocation2 + $0x70] sm:$0xff]
    %v84 = vmul.f32 %v83, %v40
    %85 = vst [vmem:[#allocation7 + $0x70] sm:$0xff] %v84
    %v86 = vld [vmem:[#allocation2 + $0x78] sm:$0xff]
    %v87 = vmul.f32 %v86, %v40
    %88 = vst [vmem:[#allocation7 + $0x78] sm:$0xff] %v87
    // Predicated region
    $region18: #{tpu_custom_call.1} parent=1 // pred_check
      _
    $region19: #{tpu_custom_call.1} parent=1 // pred_check_branch
      %90 = sbr.rel (0) target = $region21
    $region20: #{tpu_custom_call.1} parent=1 // pred_region
      %92 = vsyncadd [#allocation4], 0
      %s94 = sshll.u32 [#allocation7], 4
      %s95 = int_to_ptr.vmem [resolvable:$true] %s94
      %s96 = sshll.u32 %s2, 4
      %s97 = int_to_ptr.hbm [resolvable:$true] %s96
      %99 = dma.vmem_to_hbm [thread:$0]  %s95, 2048, %s97, [#allocation4]
    $region21: #{tpu_custom_call.1} parent=1 // pred_fallthru
      _
    // Predicated region
    $region22: #{tpu_custom_call.1} parent=1 // pred_check
      _
    $region23: #{tpu_custom_call.1} parent=1 // pred_check_branch
      %101 = sbr.rel (0) target = $region25
    $region24: #{tpu_custom_call.1} parent=1 // pred_region
      %103 = dma.done [#allocation4], 2048
    $region25: #{tpu_custom_call.1} parent=1 // pred_fallthru
      _
    %104 = vsyncpa [#allocation3], 1
    %105 = vsyncpa [#allocation6], 1
    %106 = vsyncpa [#allocation4], 1

</llo_original>
